<compile_context>
chip_gen: v7x
topology: tpu7x:2x2x1
jax: 0.10.0
libtpu: 0.0.40
codegen_flags: <defaults>
</compile_context>

<pallas_src>
import functools

import jax
import jax.numpy as jnp
from jax.experimental import pallas as pl
from jax.experimental.pallas import tpu as pltpu


def _prelu(v, a):
    return jnp.maximum(v, 0.0) + a * jnp.minimum(v, 0.0)


def _round_up(x, m):
    return (x + m - 1) // m * m


def enet_encoder_kernel(x_ref, w1_ref, w3_ref, wo_ref, wr_ref, sh_ref,
                        mask_ref, pa_ref, o_ref, *, H, W):
    """One grid step processes the full (B, Cin, H*W) batch block."""
    B, _, S = x_ref.shape
    CP = w1_ref.shape[0]              # internal channels padded to 8 sublanes
    Cout = wo_ref.shape[0]
    T = B * S                         # batch lane-folded spatial extent

    a_in, a_mid, a_out = pa_ref[0], pa_ref[1], pa_ref[2]   # PReLU slopes (SMEM)

    # Lane-fold the whole batch into one (Cin, B*S) slab.  Each piece is a
    # multiple of 128 lanes wide, so the concat is pure placement.
    x = jnp.concatenate([x_ref[b] for b in range(B)], axis=1)        # (Cin, T)

    # ---- 1x1 input conv (BN1 scale pre-folded into w1) + shift + PReLU ------
    y1 = jnp.dot(w1_ref[...], x, preferred_element_type=jnp.float32)  # (CP, T)
    y1 = _prelu(y1 + sh_ref[:CP, 0:1], a_in)

    # ---- 3x3 conv, stride 1, pad 1: M-axis tap fusion ------------------------
    # One MXU push gives all nine per-tap outputs stacked along sublanes (each
    # (CP, T) slab 8-sublane aligned); then roll + border-mask + accumulate.
    z = jnp.dot(w3_ref[...], y1, preferred_element_type=jnp.float32)  # (9*CP, T)
    taps = [(ky - 1, kx - 1) for ky in range(3) for kx in range(3)]
    y2 = z[4 * CP:5 * CP]             # center tap (dy = dx = 0), always valid
    for k, (dy, dx) in enumerate(taps):
        off = dy * W + dx
        if off == 0:
            continue
        zk = pltpu.roll(z[k * CP:(k + 1) * CP], (-off) % T, axis=1)
        y2 = y2 + zk * mask_ref[k:k + 1]      # precomputed (1, T) border mask
    y2 = _prelu(y2 + sh_ref[:CP, 1:2], a_mid)

    # ---- 1x1 output conv (BN3 scale folded) + shift; Dropout2d == id (eval) --
    # Other path (channel repeat of x) as a tiny 0/1 matmul: no sublane concat.
    main = jnp.dot(wo_ref[...], y2, preferred_element_type=jnp.float32)  # (Cout, T)
    other = jnp.dot(wr_ref[...], x, preferred_element_type=jnp.float32)  # (Cout, T)
    out = _prelu(main + other + sh_ref[:Cout, 2:3], a_out)

    # ---- per-image stores (lane slices at multiples of 128, lane-dense) ------
    for b in range(B):
        o_ref[b] = out[:, b * S:(b + 1) * S]


def enet_encoder_forward(x_nchw, packed):
    """Runs the fused ENet encoder bottleneck. Input/output are NCHW."""
    N, Cin, H, W = x_nchw.shape
    S = H * W
    Cout = packed["wo"].shape[0]

    x = x_nchw.reshape(N, Cin, S).astype(jnp.float32)   # free view of NCHW

    def full(arr):
        return pl.BlockSpec(arr.shape, lambda n, _nd=arr.ndim: (0,) * _nd)

    kernel = functools.partial(enet_encoder_kernel, H=H, W=W)

    out = pl.pallas_call(
        kernel,
        out_shape=jax.ShapeDtypeStruct((N, Cout, S), jnp.float32),
        grid=(1,),                                      # single fat step
        in_specs=[
            pl.BlockSpec((N, Cin, S), lambda n: (0, 0, 0)),        # x
            full(packed["w1"]), full(packed["w3"]), full(packed["wo"]),
            full(packed["wr"]), full(packed["sh"]), full(packed["mask"]),
            pl.BlockSpec(memory_space=pltpu.MemorySpace.SMEM),     # prelu slopes
        ],
        out_specs=pl.BlockSpec((N, Cout, S), lambda n: (0, 0, 0)),
    )(x, packed["w1"], packed["w3"], packed["wo"], packed["wr"],
      packed["sh"], packed["mask"], packed["prelu"])

    return out.reshape(N, Cout, H, W)


def init_params(key, Cin, Cout, internal_scale):
    """Deterministic synthetic parameters (shapes match the PyTorch module)."""
    Cint = Cout // internal_scale
    eps = 1e-3
    ks = jax.random.split(key, 7)

    def bn_fold(k, C):
        kg, kb, km, kv = jax.random.split(k, 4)
        gamma = 1.0 + 0.1 * jax.random.normal(kg, (C,))
        beta = 0.1 * jax.random.normal(kb, (C,))
        mean = 0.1 * jax.random.normal(km, (C,))
        var = 1.0 + 0.1 * jax.random.uniform(kv, (C,))
        scale = gamma / jnp.sqrt(var + eps)
        shift = beta - mean * scale
        return scale.astype(jnp.float32), shift.astype(jnp.float32)

    w1_oihw = 0.1 * jax.random.normal(ks[0], (Cint, Cin, 1, 1), dtype=jnp.float32)
    w3_oihw = 0.1 * jax.random.normal(ks[1], (Cint, Cint, 3, 3), dtype=jnp.float32)
    wo_oihw = 0.1 * jax.random.normal(ks[2], (Cout, Cint, 1, 1), dtype=jnp.float32)
    b3 = 0.1 * jax.random.normal(ks[3], (Cint,), dtype=jnp.float32)

    s1, t1 = bn_fold(ks[4], Cint)
    s2, t2 = bn_fold(ks[5], Cint)
    s3, t3 = bn_fold(ks[6], Cout)

    return dict(w1=w1_oihw, w3=w3_oihw, wo=wo_oihw, b3=b3,
                s1=s1, t1=t1, s2=s2, t2=t2, s3=s3, t3=t3,
                prelu=jnp.full((3,), 0.25, jnp.float32))


def pack_params(raw, N, H, W):
    """One-time prep: fold BN scales into conv weights, pad internal channels
    to an 8-sublane multiple, pack the nine 3x3 taps along M, pack the
    remaining shifts, and precompute the per-tap border masks over B*H*W."""
    Cint, Cin = raw["w1"].shape[:2]
    Cout = raw["wo"].shape[0]
    CP = _round_up(Cint, 8)
    Cmax = max(CP, _round_up(Cout, 8))
    S = H * W
    T = N * S

    s1, t1 = raw["s1"], raw["t1"]
    s2, t2 = raw["s2"], raw["t2"]
    s3, t3 = raw["s3"], raw["t3"]

    # 1x1 input conv, BN1 scale folded into rows, rows padded to CP.
    w1 = raw["w1"][:, :, 0, 0] * s1[:, None]
    w1p = jnp.zeros((CP, Cin), jnp.float32).at[:Cint].set(w1)

    # 3x3 conv packed along M: rows [k*CP, k*CP+Cint) hold tap k = (ky, kx)
    # (ky-major) with BN2 scale folded; padded rows/cols are zero.
    w3_tap = jnp.transpose(raw["w3"], (2, 3, 0, 1)).reshape(9, Cint, Cint)
    w3_tap = w3_tap * s2[None, :, None]
    w3p = jnp.zeros((9, CP, CP), jnp.float32).at[:, :Cint, :Cint].set(w3_tap)
    w3p = w3p.reshape(9 * CP, CP)

    # 1x1 output conv, BN3 scale folded, internal (K) dim padded.
    wo = raw["wo"][:, :, 0, 0] * s3[:, None]
    wop = jnp.zeros((Cout, CP), jnp.float32).at[:, :Cint].set(wo)

    # Other path: channel repeat as a 0/1 matrix (torch .repeat(1, r, 1, 1)).
    wr = jnp.tile(jnp.eye(Cin, dtype=jnp.float32), (Cout // Cin, 1))

    # Remaining per-channel shifts, one packed (Cmax, 3) slab:
    #   col 0: BN1 shift, col 1: s2*b3 + BN2 shift, col 2: BN3 shift.
    sh = jnp.zeros((Cmax, 3), jnp.float32)
    sh = sh.at[:Cint, 0].set(t1)
    sh = sh.at[:Cint, 1].set(s2 * raw["b3"] + t2)
    sh = sh.at[:Cout, 2].set(t3)

    # Per-tap 0/1 border masks over the batch-folded spatial axis (repeat per
    # image via p % S); rolls that wrap across image boundaries are zeroed.
    p = jnp.arange(T, dtype=jnp.int32)
    s = p % S
    h = s // W
    w = s % W
    rows = []
    for ky in range(3):
        for kx in range(3):
            dy, dx = ky - 1, kx - 1
            valid = (h + dy >= 0) & (h + dy < H) & (w + dx >= 0) & (w + dx < W)
            rows.append(valid.astype(jnp.float32))
    mask = jnp.zeros((16, T), jnp.float32).at[:9].set(jnp.stack(rows, 0))

    return dict(w1=w1p, w3=w3p, wo=wop, wr=wr, sh=sh, mask=mask,
                prelu=raw["prelu"].astype(jnp.float32))


def ref_forward(x_nchw, raw):
    """Pure-JAX reference (NCHW, independent conv path) for validation."""
    prelu = lambda v, a: jnp.maximum(v, 0.0) + a * jnp.minimum(v, 0.0)
    p = raw["prelu"]
    x = x_nchw.astype(jnp.float32)
    Cin = x.shape[1]
    Cout = raw["wo"].shape[0]

    def bn(v, s, t):
        return v * s[None, :, None, None] + t[None, :, None, None]

    y = jnp.einsum("nchw,dc->ndhw", x, raw["w1"][:, :, 0, 0])
    y = prelu(bn(y, raw["s1"], raw["t1"]), p[0])

    w3 = jnp.transpose(raw["w3"], (2, 3, 1, 0))       # OIHW -> HWIO
    y2 = jax.lax.conv_general_dilated(
        y, w3, window_strides=(1, 1), padding=((1, 1), (1, 1)),
        dimension_numbers=("NCHW", "HWIO", "NCHW"))
    y2 = y2 + raw["b3"][None, :, None, None]
    y2 = prelu(bn(y2, raw["s2"], raw["t2"]), p[1])

    main = jnp.einsum("nchw,dc->ndhw", y2, raw["wo"][:, :, 0, 0])
    main = bn(main, raw["s3"], raw["t3"])

    other = jnp.concatenate([x] * (Cout // Cin), axis=1)
    return prelu(main + other, p[2])


if __name__ == "__main__":
    # Module config: input_channels=4, output_channels=8, internal_scale=2,
    # downsample=False, dilated=None, dropout_prob=0.1 (identity in eval).
    N, Cin, H, W = 2, 4, 16, 16
    Cout, internal_scale = 8, 2

    key = jax.random.PRNGKey(0)
    kx, kp = jax.random.split(key)
    x = jax.random.normal(kx, (N, Cin, H, W), dtype=jnp.float32)   # NCHW like PyTorch
    raw = init_params(kp, Cin, Cout, internal_scale)
    packed = pack_params(raw, N, H, W)     # one-time host-side folding/packing

    out = enet_encoder_forward(x, packed)
    out = jax.block_until_ready(out)

    ref = ref_forward(x, raw)
    assert out.shape == (N, Cout, H, W), out.shape
    max_err = float(jnp.max(jnp.abs(out - ref)))
    assert jnp.allclose(out, ref, atol=2e-4, rtol=2e-4), max_err

    print("KERNEL_OK")
</pallas_src>

<mosaic_0001>
module attributes {stable_mosaic.version = 11 : i64} {
  func.func @enet_encoder_kernel(%arg0: i32, %arg1: memref<2x4x256xf32, #tpu.memory_space<vmem>>, %arg2: memref<8x4xf32, #tpu.memory_space<vmem>>, %arg3: memref<72x8xf32, #tpu.memory_space<vmem>>, %arg4: memref<8x8xf32, #tpu.memory_space<vmem>>, %arg5: memref<8x4xf32, #tpu.memory_space<vmem>>, %arg6: memref<8x3xf32, #tpu.memory_space<vmem>>, %arg7: memref<16x512xf32, #tpu.memory_space<vmem>>, %arg8: memref<3xf32, #tpu.memory_space<smem>>, %arg9: memref<2x8x256xf32, #tpu.memory_space<vmem>>) attributes {dimension_semantics = [#tpu.dimension_semantics<arbitrary>], iteration_bounds = array<i64: 1>, scalar_prefetch = 0 : i64, scratch_operands = 0 : i64, tpu.core_type = #tpu.core_type<tc>, window_params = [{pipeline_mode = #tpu.pipeline_mode<synchronous>, transform_indices = @transform_0, window_bounds = array<i64: 2, 4, 256>}, {pipeline_mode = #tpu.pipeline_mode<synchronous>, transform_indices = @transform_1, window_bounds = array<i64: 8, 4>}, {pipeline_mode = #tpu.pipeline_mode<synchronous>, transform_indices = @transform_2, window_bounds = array<i64: 72, 8>}, {pipeline_mode = #tpu.pipeline_mode<synchronous>, transform_indices = @transform_3, window_bounds = array<i64: 8, 8>}, {pipeline_mode = #tpu.pipeline_mode<synchronous>, transform_indices = @transform_4, window_bounds = array<i64: 8, 4>}, {pipeline_mode = #tpu.pipeline_mode<synchronous>, transform_indices = @transform_5, window_bounds = array<i64: 8, 3>}, {pipeline_mode = #tpu.pipeline_mode<synchronous>, transform_indices = @transform_6, window_bounds = array<i64: 16, 512>}, {transform_indices = @transform_7, window_bounds = array<i64: 3>}, {pipeline_mode = #tpu.pipeline_mode<synchronous>, transform_indices = @transform_8, window_bounds = array<i64: 2, 8, 256>}]} {
    %c0 = arith.constant 0 : index
    %0 = memref.load %arg8[%c0] : memref<3xf32, #tpu.memory_space<smem>>
    %c1 = arith.constant 1 : index
    %1 = memref.load %arg8[%c1] : memref<3xf32, #tpu.memory_space<smem>>
    %c2 = arith.constant 2 : index
    %2 = memref.load %arg8[%c2] : memref<3xf32, #tpu.memory_space<smem>>
    %c0_0 = arith.constant 0 : index
    %c0_1 = arith.constant 0 : index
    %c0_2 = arith.constant 0 : index
    %3 = vector.load %arg1[%c0_0, %c0_1, %c0_2] : memref<2x4x256xf32, #tpu.memory_space<vmem>>, vector<1x4x256xf32>
    %4 = vector.shape_cast %3 : vector<1x4x256xf32> to vector<4x256xf32>
    %c1_3 = arith.constant 1 : index
    %c0_4 = arith.constant 0 : index
    %c0_5 = arith.constant 0 : index
    %5 = vector.load %arg1[%c1_3, %c0_4, %c0_5] : memref<2x4x256xf32, #tpu.memory_space<vmem>>, vector<1x4x256xf32>
    %6 = vector.shape_cast %5 : vector<1x4x256xf32> to vector<4x256xf32>
    %7 = tpu.concatenate %4, %6 in 1 : vector<4x256xf32>, vector<4x256xf32> -> vector<4x512xf32>
    %c0_6 = arith.constant 0 : index
    %c0_7 = arith.constant 0 : index
    %8 = vector.load %arg2[%c0_6, %c0_7] : memref<8x4xf32, #tpu.memory_space<vmem>>, vector<8x4xf32>
    %cst = arith.constant dense<0.000000e+00> : vector<8x512xf32>
    %9 = tpu.matmul %8, %7, %cst {dimension_numbers = #tpu.dot_dimension_numbers<[1], [0], [0], [1], [0, 0, 1, 1], [], []>} : vector<8x4xf32>, vector<4x512xf32>, vector<8x512xf32> -> vector<8x512xf32>
    %c0_8 = arith.constant 0 : index
    %c0_9 = arith.constant 0 : index
    %10 = vector.load %arg6[%c0_8, %c0_9] : memref<8x3xf32, #tpu.memory_space<vmem>>, vector<8x1xf32>
    %11 = vector.broadcast %10 : vector<8x1xf32> to vector<8x512xf32>
    %12 = arith.addf %9, %11 : vector<8x512xf32>
    %cst_10 = arith.constant 0.000000e+00 : f32
    %13 = vector.broadcast %cst_10 : f32 to vector<8x512xf32>
    %14 = arith.maximumf %12, %13 : vector<8x512xf32>
    %cst_11 = arith.constant 0.000000e+00 : f32
    %15 = vector.broadcast %cst_11 : f32 to vector<8x512xf32>
    %16 = arith.minimumf %12, %15 : vector<8x512xf32>
    %17 = vector.broadcast %0 : f32 to vector<8x512xf32>
    %18 = arith.mulf %17, %16 : vector<8x512xf32>
    %19 = arith.addf %14, %18 : vector<8x512xf32>
    %c0_12 = arith.constant 0 : index
    %c0_13 = arith.constant 0 : index
    %20 = vector.load %arg3[%c0_12, %c0_13] : memref<72x8xf32, #tpu.memory_space<vmem>>, vector<72x8xf32>
    %cst_14 = arith.constant dense<0.000000e+00> : vector<72x512xf32>
    %21 = tpu.matmul %20, %19, %cst_14 {dimension_numbers = #tpu.dot_dimension_numbers<[1], [0], [0], [1], [0, 0, 1, 1], [], []>} : vector<72x8xf32>, vector<8x512xf32>, vector<72x512xf32> -> vector<72x512xf32>
    %22 = vector.extract_strided_slice %21 {offsets = [32, 0], sizes = [8, 512], strides = [1, 1]} : vector<72x512xf32> to vector<8x512xf32>
    %23 = vector.extract_strided_slice %21 {offsets = [0, 0], sizes = [8, 512], strides = [1, 1]} : vector<72x512xf32> to vector<8x512xf32>
    %c17_i32 = arith.constant 17 : i32
    %24 = tpu.dynamic_rotate %23 by %c17_i32 dim 1 : vector<8x512xf32>, i32 -> vector<8x512xf32>
    %c0_15 = arith.constant 0 : index
    %c0_16 = arith.constant 0 : index
    %25 = vector.load %arg7[%c0_15, %c0_16] : memref<16x512xf32, #tpu.memory_space<vmem>>, vector<1x512xf32>
    %26 = vector.broadcast %25 : vector<1x512xf32> to vector<8x512xf32>
    %27 = arith.mulf %24, %26 : vector<8x512xf32>
    %28 = arith.addf %22, %27 : vector<8x512xf32>
    %29 = vector.extract_strided_slice %21 {offsets = [8, 0], sizes = [8, 512], strides = [1, 1]} : vector<72x512xf32> to vector<8x512xf32>
    %c16_i32 = arith.constant 16 : i32
    %30 = tpu.dynamic_rotate %29 by %c16_i32 dim 1 : vector<8x512xf32>, i32 -> vector<8x512xf32>
    %c1_17 = arith.constant 1 : index
    %c0_18 = arith.constant 0 : index
    %31 = vector.load %arg7[%c1_17, %c0_18] : memref<16x512xf32, #tpu.memory_space<vmem>>, vector<1x512xf32>
    %32 = vector.broadcast %31 : vector<1x512xf32> to vector<8x512xf32>
    %33 = arith.mulf %30, %32 : vector<8x512xf32>
    %34 = arith.addf %28, %33 : vector<8x512xf32>
    %35 = vector.extract_strided_slice %21 {offsets = [16, 0], sizes = [8, 512], strides = [1, 1]} : vector<72x512xf32> to vector<8x512xf32>
    %c15_i32 = arith.constant 15 : i32
    %36 = tpu.dynamic_rotate %35 by %c15_i32 dim 1 : vector<8x512xf32>, i32 -> vector<8x512xf32>
    %c2_19 = arith.constant 2 : index
    %c0_20 = arith.constant 0 : index
    %37 = vector.load %arg7[%c2_19, %c0_20] : memref<16x512xf32, #tpu.memory_space<vmem>>, vector<1x512xf32>
    %38 = vector.broadcast %37 : vector<1x512xf32> to vector<8x512xf32>
    %39 = arith.mulf %36, %38 : vector<8x512xf32>
    %40 = arith.addf %34, %39 : vector<8x512xf32>
    %41 = vector.extract_strided_slice %21 {offsets = [24, 0], sizes = [8, 512], strides = [1, 1]} : vector<72x512xf32> to vector<8x512xf32>
    %c1_i32 = arith.constant 1 : i32
    %42 = tpu.dynamic_rotate %41 by %c1_i32 dim 1 : vector<8x512xf32>, i32 -> vector<8x512xf32>
    %c3 = arith.constant 3 : index
    %c0_21 = arith.constant 0 : index
    %43 = vector.load %arg7[%c3, %c0_21] : memref<16x512xf32, #tpu.memory_space<vmem>>, vector<1x512xf32>
    %44 = vector.broadcast %43 : vector<1x512xf32> to vector<8x512xf32>
    %45 = arith.mulf %42, %44 : vector<8x512xf32>
    %46 = arith.addf %40, %45 : vector<8x512xf32>
    %47 = vector.extract_strided_slice %21 {offsets = [40, 0], sizes = [8, 512], strides = [1, 1]} : vector<72x512xf32> to vector<8x512xf32>
    %c511_i32 = arith.constant 511 : i32
    %48 = tpu.dynamic_rotate %47 by %c511_i32 dim 1 : vector<8x512xf32>, i32 -> vector<8x512xf32>
    %c5 = arith.constant 5 : index
    %c0_22 = arith.constant 0 : index
    %49 = vector.load %arg7[%c5, %c0_22] : memref<16x512xf32, #tpu.memory_space<vmem>>, vector<1x512xf32>
    %50 = vector.broadcast %49 : vector<1x512xf32> to vector<8x512xf32>
    %51 = arith.mulf %48, %50 : vector<8x512xf32>
    %52 = arith.addf %46, %51 : vector<8x512xf32>
    %53 = vector.extract_strided_slice %21 {offsets = [48, 0], sizes = [8, 512], strides = [1, 1]} : vector<72x512xf32> to vector<8x512xf32>
    %c497_i32 = arith.constant 497 : i32
    %54 = tpu.dynamic_rotate %53 by %c497_i32 dim 1 : vector<8x512xf32>, i32 -> vector<8x512xf32>
    %c6 = arith.constant 6 : index
    %c0_23 = arith.constant 0 : index
    %55 = vector.load %arg7[%c6, %c0_23] : memref<16x512xf32, #tpu.memory_space<vmem>>, vector<1x512xf32>
    %56 = vector.broadcast %55 : vector<1x512xf32> to vector<8x512xf32>
    %57 = arith.mulf %54, %56 : vector<8x512xf32>
    %58 = arith.addf %52, %57 : vector<8x512xf32>
    %59 = vector.extract_strided_slice %21 {offsets = [56, 0], sizes = [8, 512], strides = [1, 1]} : vector<72x512xf32> to vector<8x512xf32>
    %c496_i32 = arith.constant 496 : i32
    %60 = tpu.dynamic_rotate %59 by %c496_i32 dim 1 : vector<8x512xf32>, i32 -> vector<8x512xf32>
    %c7 = arith.constant 7 : index
    %c0_24 = arith.constant 0 : index
    %61 = vector.load %arg7[%c7, %c0_24] : memref<16x512xf32, #tpu.memory_space<vmem>>, vector<1x512xf32>
    %62 = vector.broadcast %61 : vector<1x512xf32> to vector<8x512xf32>
    %63 = arith.mulf %60, %62 : vector<8x512xf32>
    %64 = arith.addf %58, %63 : vector<8x512xf32>
    %65 = vector.extract_strided_slice %21 {offsets = [64, 0], sizes = [8, 512], strides = [1, 1]} : vector<72x512xf32> to vector<8x512xf32>
    %c495_i32 = arith.constant 495 : i32
    %66 = tpu.dynamic_rotate %65 by %c495_i32 dim 1 : vector<8x512xf32>, i32 -> vector<8x512xf32>
    %c8 = arith.constant 8 : index
    %c0_25 = arith.constant 0 : index
    %67 = vector.load %arg7[%c8, %c0_25] : memref<16x512xf32, #tpu.memory_space<vmem>>, vector<1x512xf32>
    %68 = vector.broadcast %67 : vector<1x512xf32> to vector<8x512xf32>
    %69 = arith.mulf %66, %68 : vector<8x512xf32>
    %70 = arith.addf %64, %69 : vector<8x512xf32>
    %c0_26 = arith.constant 0 : index
    %c1_27 = arith.constant 1 : index
    %71 = vector.load %arg6[%c0_26, %c1_27] : memref<8x3xf32, #tpu.memory_space<vmem>>, vector<8x1xf32>
    %72 = vector.broadcast %71 : vector<8x1xf32> to vector<8x512xf32>
    %73 = arith.addf %70, %72 : vector<8x512xf32>
    %cst_28 = arith.constant 0.000000e+00 : f32
    %74 = vector.broadcast %cst_28 : f32 to vector<8x512xf32>
    %75 = arith.maximumf %73, %74 : vector<8x512xf32>
    %cst_29 = arith.constant 0.000000e+00 : f32
    %76 = vector.broadcast %cst_29 : f32 to vector<8x512xf32>
    %77 = arith.minimumf %73, %76 : vector<8x512xf32>
    %78 = vector.broadcast %1 : f32 to vector<8x512xf32>
    %79 = arith.mulf %78, %77 : vector<8x512xf32>
    %80 = arith.addf %75, %79 : vector<8x512xf32>
    %c0_30 = arith.constant 0 : index
    %c0_31 = arith.constant 0 : index
    %81 = vector.load %arg4[%c0_30, %c0_31] : memref<8x8xf32, #tpu.memory_space<vmem>>, vector<8x8xf32>
    %cst_32 = arith.constant dense<0.000000e+00> : vector<8x512xf32>
    %82 = tpu.matmul %81, %80, %cst_32 {dimension_numbers = #tpu.dot_dimension_numbers<[1], [0], [0], [1], [0, 0, 1, 1], [], []>} : vector<8x8xf32>, vector<8x512xf32>, vector<8x512xf32> -> vector<8x512xf32>
    %c0_33 = arith.constant 0 : index
    %c0_34 = arith.constant 0 : index
    %83 = vector.load %arg5[%c0_33, %c0_34] : memref<8x4xf32, #tpu.memory_space<vmem>>, vector<8x4xf32>
    %cst_35 = arith.constant dense<0.000000e+00> : vector<8x512xf32>
    %84 = tpu.matmul %83, %7, %cst_35 {dimension_numbers = #tpu.dot_dimension_numbers<[1], [0], [0], [1], [0, 0, 1, 1], [], []>} : vector<8x4xf32>, vector<4x512xf32>, vector<8x512xf32> -> vector<8x512xf32>
    %85 = arith.addf %82, %84 : vector<8x512xf32>
    %c0_36 = arith.constant 0 : index
    %c2_37 = arith.constant 2 : index
    %86 = vector.load %arg6[%c0_36, %c2_37] : memref<8x3xf32, #tpu.memory_space<vmem>>, vector<8x1xf32>
    %87 = vector.broadcast %86 : vector<8x1xf32> to vector<8x512xf32>
    %88 = arith.addf %85, %87 : vector<8x512xf32>
    %cst_38 = arith.constant 0.000000e+00 : f32
    %89 = vector.broadcast %cst_38 : f32 to vector<8x512xf32>
    %90 = arith.maximumf %88, %89 : vector<8x512xf32>
    %cst_39 = arith.constant 0.000000e+00 : f32
    %91 = vector.broadcast %cst_39 : f32 to vector<8x512xf32>
    %92 = arith.minimumf %88, %91 : vector<8x512xf32>
    %93 = vector.broadcast %2 : f32 to vector<8x512xf32>
    %94 = arith.mulf %93, %92 : vector<8x512xf32>
    %95 = arith.addf %90, %94 : vector<8x512xf32>
    %96 = vector.extract_strided_slice %95 {offsets = [0, 0], sizes = [8, 256], strides = [1, 1]} : vector<8x512xf32> to vector<8x256xf32>
    %c0_40 = arith.constant 0 : index
    %c0_41 = arith.constant 0 : index
    %c0_42 = arith.constant 0 : index
    %97 = vector.load %arg9[%c0_40, %c0_41, %c0_42] : memref<2x8x256xf32, #tpu.memory_space<vmem>>, vector<1x8x256xf32>
    %98 = vector.shape_cast %97 : vector<1x8x256xf32> to vector<8x256xf32>
    %99 = vector.shape_cast %96 : vector<8x256xf32> to vector<1x8x256xf32>
    tpu.vector_store %arg9[%c0_40, %c0_41, %c0_42], %99 {strides = array<i32>} : memref<2x8x256xf32, #tpu.memory_space<vmem>>, vector<1x8x256xf32>,
    %100 = vector.extract_strided_slice %95 {offsets = [0, 256], sizes = [8, 256], strides = [1, 1]} : vector<8x512xf32> to vector<8x256xf32>
    %c1_43 = arith.constant 1 : index
    %c0_44 = arith.constant 0 : index
    %c0_45 = arith.constant 0 : index
    %101 = vector.load %arg9[%c1_43, %c0_44, %c0_45] : memref<2x8x256xf32, #tpu.memory_space<vmem>>, vector<1x8x256xf32>
    %102 = vector.shape_cast %101 : vector<1x8x256xf32> to vector<8x256xf32>
    %103 = vector.shape_cast %100 : vector<8x256xf32> to vector<1x8x256xf32>
    tpu.vector_store %arg9[%c1_43, %c0_44, %c0_45], %103 {strides = array<i32>} : memref<2x8x256xf32, #tpu.memory_space<vmem>>, vector<1x8x256xf32>,
    return
  }
  func.func @transform_0(%arg0: i32) -> (i32, i32, i32) {
    %c0_i32 = arith.constant 0 : i32
    %c0_i32_0 = arith.constant 0 : i32
    %c0_i32_1 = arith.constant 0 : i32
    %c0_i32_2 = arith.constant 0 : i32
    return %c0_i32, %c0_i32_0, %c0_i32_1 : i32, i32, i32
  }
  func.func @transform_1(%arg0: i32) -> (i32, i32) {
    %c0_i32 = arith.constant 0 : i32
    %c0_i32_0 = arith.constant 0 : i32
    %c0_i32_1 = arith.constant 0 : i32
    return %c0_i32, %c0_i32_0 : i32, i32
  }
  func.func @transform_2(%arg0: i32) -> (i32, i32) {
    %c0_i32 = arith.constant 0 : i32
    %c0_i32_0 = arith.constant 0 : i32
    %c0_i32_1 = arith.constant 0 : i32
    return %c0_i32, %c0_i32_0 : i32, i32
  }
  func.func @transform_3(%arg0: i32) -> (i32, i32) {
    %c0_i32 = arith.constant 0 : i32
    %c0_i32_0 = arith.constant 0 : i32
    %c0_i32_1 = arith.constant 0 : i32
    return %c0_i32, %c0_i32_0 : i32, i32
  }
  func.func @transform_4(%arg0: i32) -> (i32, i32) {
    %c0_i32 = arith.constant 0 : i32
    %c0_i32_0 = arith.constant 0 : i32
    %c0_i32_1 = arith.constant 0 : i32
    return %c0_i32, %c0_i32_0 : i32, i32
  }
  func.func @transform_5(%arg0: i32) -> (i32, i32) {
    %c0_i32 = arith.constant 0 : i32
    %c0_i32_0 = arith.constant 0 : i32
    %c0_i32_1 = arith.constant 0 : i32
    return %c0_i32, %c0_i32_0 : i32, i32
  }
  func.func @transform_6(%arg0: i32) -> (i32, i32) {
    %c0_i32 = arith.constant 0 : i32
    %c0_i32_0 = arith.constant 0 : i32
    %c0_i32_1 = arith.constant 0 : i32
    return %c0_i32, %c0_i32_0 : i32, i32
  }
  func.func @transform_7(%arg0: i32) -> i32 {
    %c0_i32 = arith.constant 0 : i32
    %c0_i32_0 = arith.constant 0 : i32
    return %c0_i32 : i32
  }
  func.func @transform_8(%arg0: i32) -> (i32, i32, i32) {
    %c0_i32 = arith.constant 0 : i32
    %c0_i32_0 = arith.constant 0 : i32
    %c0_i32_1 = arith.constant 0 : i32
    %c0_i32_2 = arith.constant 0 : i32
    return %c0_i32, %c0_i32_0, %c0_i32_1 : i32, i32, i32
  }
}

</mosaic_0001>

<llo_original>
// kernel: tpu_custom_call.1
$region0: #{tpu_custom_call.1}
  #allocation0 [shape = 'u32[]', space=smem, size = 0x4, offset = 0x4, fixed_abs, tag = 'smem constant byte address 0x4 - core index']
  #allocation1 [shape = 'u32[144,128]{1,0:T(1,128)}', space=vmem, size = 0x12000, scoped, tag = 'internal scratch']
  %s0 = inlined_call_operand.vmem [shape: f32[2,4,256], index: 0, kind: input, shape index: {}]
  %s1 = inlined_call_operand.vmem [shape: f32[8,4], index: 1, kind: input, shape index: {}]
  %s2 = inlined_call_operand.vmem [shape: f32[72,8], index: 2, kind: input, shape index: {}]
  %s3 = inlined_call_operand.vmem [shape: f32[8,8], index: 3, kind: input, shape index: {}]
  %s4 = inlined_call_operand.vmem [shape: f32[8,4], index: 4, kind: input, shape index: {}]
  %s5 = inlined_call_operand.vmem [shape: f32[8,3], index: 5, kind: input, shape index: {}]
  %s6 = inlined_call_operand.vmem [shape: f32[16,512], index: 6, kind: input, shape index: {}]
  %s7 = inlined_call_operand.vmem [shape: f32[3], index: 7, kind: input, shape index: {}]
  %s8 = inlined_call_operand.hbm [shape: f32[2,8,256], index: 8, kind: output, shape index: {}]
  %s9 = sld [smem:[#allocation0]]
  $region46: #{tpu_custom_call.1} parent=0
    _
  %s11 = ssub.s32 1, %s9
  %s12 = scalar_select 0, %s11, %s9
  $region1: #{tpu_custom_call.1} parent=0
    #allocation2 [shape = 'u8[512]{0}', space=smem, size = 0x200, scoped, tag = 'input window, operand 7, single buffered']
    #allocation3 [shape = 's32[1]{0}', space=sflag, size = 0x4, scoped, tag = 'scoped memory for tpu_custom_call.1']
    #allocation4 [shape = 's32[1]{0}', space=sflag, size = 0x4, scoped, tag = 'scoped memory for tpu_custom_call.1']
    #allocation5 [shape = 'u8[16384]{0}', space=vmem, size = 0x4000, scoped, tag = 'output window, operand 0, single buffered']
    %13 = vsyncpa [#allocation4], 0
    %14 = vsyncpa [#allocation3], 0
    // Predicated region
    $region2: #{tpu_custom_call.1} parent=1 // pred_check
      _
    $region3: #{tpu_custom_call.1} parent=1 // pred_check_branch
      %16 = sbr.rel (0) target = $region5
    $region4: #{tpu_custom_call.1} parent=1 // pred_region
      _
    $region5: #{tpu_custom_call.1} parent=1 // pred_fallthru
      _
    // Predicated region
    $region6: #{tpu_custom_call.1} parent=1 // pred_check
      _
    $region7: #{tpu_custom_call.1} parent=1 // pred_check_branch
      %18 = sbr.rel (0) target = $region9
    $region8: #{tpu_custom_call.1} parent=1 // pred_region
      _
    $region9: #{tpu_custom_call.1} parent=1 // pred_fallthru
      _
    // Predicated region
    $region10: #{tpu_custom_call.1} parent=1 // pred_check
      _
    $region11: #{tpu_custom_call.1} parent=1 // pred_check_branch
      %20 = sbr.rel (0) target = $region13
    $region12: #{tpu_custom_call.1} parent=1 // pred_region
      _
    $region13: #{tpu_custom_call.1} parent=1 // pred_fallthru
      _
    // Predicated region
    $region14: #{tpu_custom_call.1} parent=1 // pred_check
      _
    $region15: #{tpu_custom_call.1} parent=1 // pred_check_branch
      %22 = sbr.rel (0) target = $region17
    $region16: #{tpu_custom_call.1} parent=1 // pred_region
      _
    $region17: #{tpu_custom_call.1} parent=1 // pred_fallthru
      _
    // Predicated region
    $region18: #{tpu_custom_call.1} parent=1 // pred_check
      _
    $region19: #{tpu_custom_call.1} parent=1 // pred_check_branch
      %24 = sbr.rel (0) target = $region21
    $region20: #{tpu_custom_call.1} parent=1 // pred_region
      _
    $region21: #{tpu_custom_call.1} parent=1 // pred_fallthru
      _
    // Predicated region
    $region22: #{tpu_custom_call.1} parent=1 // pred_check
      _
    $region23: #{tpu_custom_call.1} parent=1 // pred_check_branch
      %26 = sbr.rel (0) target = $region25
    $region24: #{tpu_custom_call.1} parent=1 // pred_region
      _
    $region25: #{tpu_custom_call.1} parent=1 // pred_fallthru
      _
    // Predicated region
    $region26: #{tpu_custom_call.1} parent=1 // pred_check
      _
    $region27: #{tpu_custom_call.1} parent=1 // pred_check_branch
      %28 = sbr.rel (0) target = $region29
    $region28: #{tpu_custom_call.1} parent=1 // pred_region
      _
    $region29: #{tpu_custom_call.1} parent=1 // pred_fallthru
      _
    // Predicated region
    $region30: #{tpu_custom_call.1} parent=1 // pred_check
      _
    $region31: #{tpu_custom_call.1} parent=1 // pred_check_branch
      %30 = sbr.rel (0) target = $region33
    $region32: #{tpu_custom_call.1} parent=1 // pred_region
      %s32 = ssub.s32 16, 16
      %33 = vsyncadd [#allocation4], %s32
      %s35 = sshll.u32 %s7, 4
      %s36 = int_to_ptr.vmem [resolvable:$true] %s35
      %38 = dma.vmem_to_smem %s36, 16, [#allocation2], [#allocation4]
    $region33: #{tpu_custom_call.1} parent=1 // pred_fallthru
      _
    // Predicated region
    $region34: #{tpu_custom_call.1} parent=1 // pred_check
      _
    $region35: #{tpu_custom_call.1} parent=1 // pred_check_branch
      %40 = sbr.rel (0) target = $region37
    $region36: #{tpu_custom_call.1} parent=1 // pred_region
      %41 = dma.done [#allocation4], 16
    $region37: #{tpu_custom_call.1} parent=1 // pred_fallthru
      _
    %42 = sfence
    %s43 = sld [smem:[#allocation2]]
    %s44 = sld [smem:[#allocation2 + $0x1]]
    %s45 = sld [smem:[#allocation2 + $0x2]]
    %v46 = vld [vmem:[%s0] sm:$0xff]
    %s47 = scalar_lea.vmem %s0, 8
    %v48 = vld [vmem:[%s47] sm:$0xff]
    %v50 = vcombine.high %v46, %v46
    %v52 = vcombine.high %v48, %v48
    %v53 = vld [vmem:[%s1] sm:$0xff]
    %v54 = vld [vmem:[%s5] sm:$0xff]
    %56 = vset.pattern.permute.xlu0 0
    %57 = vperm.xlu0 %56, %v54
    %v58 = vpop.permute.xlu0 %57
    %vm60 = vcmask 31744
    %v62 = vsel %vm60, %v53, 0
    %vm64 = vcmask 1043456
    %v65 = vsel %vm64, %v46, 0
    %v67 = vsel %vm64, %v50, 0
    %v69 = vsel %vm64, %v48, 0
    %v71 = vsel %vm64, %v52, 0
    %73 = vmatprep.subr.mxu0 %v67
    %74 = vmatpush1.msra.mxu0 %v65
    %75 = vmatprep.subr.mxu0 0.0
    %76 = vmatpush1.msra.mxu0 0.0
    %77 = vmatprep.subr.mxu0 0.0
    %78 = vmatpush1.msra.mxu0 0.0
    %79 = vmatprep.subr.mxu0 0.0
    %80 = vmatpush1.msra.mxu0 0.0
    %81 = vmatprep.subr.mxu0 0.0
    %82 = vmatpush1.msra.mxu0 0.0
    %83 = vmatprep.subr.mxu0 0.0
    %84 = vmatpush1.msra.mxu0 0.0
    %85 = vmatprep.subr.mxu0 0.0
    %86 = vmatpush1.msra.mxu0 0.0
    %87 = vmatprep.subr.mxu0 0.0
    %88 = vmatpush1.msra.mxu0 0.0
    %89 = vmatprep.subr.mxu0 0.0
    %90 = vmatpush1.msra.mxu0 0.0
    %91 = vmatprep.subr.mxu0 0.0
    %92 = vmatpush1.msra.mxu0 0.0
    %93 = vmatprep.subr.mxu0 0.0
    %94 = vmatpush1.msra.mxu0 0.0
    %95 = vmatprep.subr.mxu0 0.0
    %96 = vmatpush1.msra.mxu0 0.0
    %97 = vmatprep.subr.mxu0 0.0
    %98 = vmatpush1.msra.mxu0 0.0
    %99 = vmatprep.subr.mxu0 0.0
    %100 = vmatpush1.msra.mxu0 0.0
    %101 = vmatprep.subr.mxu0 0.0
    %102 = vmatpush1.msra.mxu0 0.0
    %103 = vmatprep.subr.mxu0 0.0
    %104 = vmatpush1.msra.mxu0 0.0
    %105 = vmatprep.subr.mxu0 0.0
    %106 = vmatpush1.msra.mxu0 0.0
    %107 = vmatprep.subr.mxu0 0.0
    %108 = vmatpush1.msra.mxu0 0.0
    %109 = vmatprep.subr.mxu0 0.0
    %110 = vmatpush1.msra.mxu0 0.0
    %111 = vmatprep.subr.mxu0 0.0
    %112 = vmatpush1.msra.mxu0 0.0
    %113 = vmatprep.subr.mxu0 0.0
    %114 = vmatpush1.msra.mxu0 0.0
    %115 = vmatprep.subr.mxu0 0.0
    %116 = vmatpush1.msra.mxu0 0.0
    %117 = vmatprep.subr.mxu0 0.0
    %118 = vmatpush1.msra.mxu0 0.0
    %119 = vmatprep.subr.mxu0 0.0
    %120 = vmatpush1.msra.mxu0 0.0
    %121 = vmatprep.subr.mxu0 0.0
    %122 = vmatpush1.msra.mxu0 0.0
    %123 = vmatprep.subr.mxu0 0.0
    %124 = vmatpush1.msra.mxu0 0.0
    %125 = vmatprep.subr.mxu0 0.0
    %126 = vmatpush1.msra.mxu0 0.0
    %127 = vmatprep.subr.mxu0 0.0
    %128 = vmatpush1.msra.mxu0 0.0
    %129 = vmatprep.subr.mxu0 0.0
    %130 = vmatpush1.msra.mxu0 0.0
    %131 = vmatprep.subr.mxu0 0.0
    %132 = vmatpush1.msra.mxu0 0.0
    %133 = vmatprep.subr.mxu0 0.0
    %134 = vmatpush1.msra.mxu0 0.0
    %135 = vmatprep.subr.mxu0 0.0
    %136 = vmatpush1.msra.mxu0 0.0
    %137 = vmatprep.mubr.f32.mxu0 0.0
    %138 = vmatmul.mubr.f32.gmra.mrb[0].mxu0 %v62
    %v139 = vpop.f32.mrb[0].mxu0
    %v140 = vadd.f32 %v58, %v139
    %v141 = vpop.f32.mrb[0].mxu0
    %v142 = vadd.f32 %v58, %v141
    %143 = vdwg.mxu0
    %144 = vmatprep.subr.mxu0 %v71
    %145 = vmatpush1.msra.mxu0 %v69
    %146 = vmatprep.subr.mxu0 0.0
    %147 = vmatpush1.msra.mxu0 0.0
    %148 = vmatprep.subr.mxu0 0.0
    %149 = vmatpush1.msra.mxu0 0.0
    %150 = vmatprep.subr.mxu0 0.0
    %151 = vmatpush1.msra.mxu0 0.0
    %152 = vmatprep.subr.mxu0 0.0
    %153 = vmatpush1.msra.mxu0 0.0
    %154 = vmatprep.subr.mxu0 0.0
    %155 = vmatpush1.msra.mxu0 0.0
    %156 = vmatprep.subr.mxu0 0.0
    %157 = vmatpush1.msra.mxu0 0.0
    %158 = vmatprep.subr.mxu0 0.0
    %159 = vmatpush1.msra.mxu0 0.0
    %160 = vmatprep.subr.mxu0 0.0
    %161 = vmatpush1.msra.mxu0 0.0
    %162 = vmatprep.subr.mxu0 0.0
    %163 = vmatpush1.msra.mxu0 0.0
    %164 = vmatprep.subr.mxu0 0.0
    %165 = vmatpush1.msra.mxu0 0.0
    %166 = vmatprep.subr.mxu0 0.0
    %167 = vmatpush1.msra.mxu0 0.0
    %168 = vmatprep.subr.mxu0 0.0
    %169 = vmatpush1.msra.mxu0 0.0
    %170 = vmatprep.subr.mxu0 0.0
    %171 = vmatpush1.msra.mxu0 0.0
    %172 = vmatprep.subr.mxu0 0.0
    %173 = vmatpush1.msra.mxu0 0.0
    %174 = vmatprep.subr.mxu0 0.0
    %175 = vmatpush1.msra.mxu0 0.0
    %176 = vmatprep.subr.mxu0 0.0
    %177 = vmatpush1.msra.mxu0 0.0
    %178 = vmatprep.subr.mxu0 0.0
    %179 = vmatpush1.msra.mxu0 0.0
    %180 = vmatprep.subr.mxu0 0.0
    %181 = vmatpush1.msra.mxu0 0.0
    %182 = vmatprep.subr.mxu0 0.0
    %183 = vmatpush1.msra.mxu0 0.0
    %184 = vmatprep.subr.mxu0 0.0
    %185 = vmatpush1.msra.mxu0 0.0
    %186 = vmatprep.subr.mxu0 0.0
    %187 = vmatpush1.msra.mxu0 0.0
    %188 = vmatprep.subr.mxu0 0.0
    %189 = vmatpush1.msra.mxu0 0.0
    %190 = vmatprep.subr.mxu0 0.0
    %191 = vmatpush1.msra.mxu0 0.0
    %192 = vmatprep.subr.mxu0 0.0
    %193 = vmatpush1.msra.mxu0 0.0
    %194 = vmatprep.subr.mxu0 0.0
    %195 = vmatpush1.msra.mxu0 0.0
    %196 = vmatprep.subr.mxu0 0.0
    %197 = vmatpush1.msra.mxu0 0.0
    %198 = vmatprep.subr.mxu0 0.0
    %199 = vmatpush1.msra.mxu0 0.0
    %200 = vmatprep.subr.mxu0 0.0
    %201 = vmatpush1.msra.mxu0 0.0
    %202 = vmatprep.subr.mxu0 0.0
    %203 = vmatpush1.msra.mxu0 0.0
    %204 = vmatprep.subr.mxu0 0.0
    %205 = vmatpush1.msra.mxu0 0.0
    %206 = vmatprep.subr.mxu0 0.0
    %207 = vmatpush1.msra.mxu0 0.0
    %208 = vmatprep.mubr.f32.mxu0 0.0
    %209 = vmatmul.mubr.f32.gmra.mrb[0].mxu0 %v62
    %v210 = vpop.f32.mrb[0].mxu0
    %v211 = vadd.f32 %v58, %v210
    %v212 = vpop.f32.mrb[0].mxu0
    %v213 = vadd.f32 %v58, %v212
    %214 = vdwg.mxu0
    %v215 = vmax.f32 %v140, 0.0
    %v216 = vmax.f32 %v142, 0.0
    %v217 = vmax.f32 %v211, 0.0
    %v218 = vmax.f32 %v213, 0.0
    %v219 = vmin.f32 %v140, 0.0
    %v220 = vmin.f32 %v142, 0.0
    %v221 = vmin.f32 %v211, 0.0
    %v222 = vmin.f32 %v213, 0.0
    %v223 = vstv %s43
    %v224 = vmul.f32 %v223, %v219
    %v225 = vmul.f32 %v223, %v220
    %v226 = vmul.f32 %v223, %v221
    %v227 = vmul.f32 %v223, %v222
    %v228 = vadd.f32 %v215, %v224
    %v229 = vadd.f32 %v216, %v225
    %v230 = vadd.f32 %v217, %v226
    %v231 = vadd.f32 %v218, %v227
    %v232 = vld [vmem:[%s2] sm:$0xff]
    %v233 = vld [vmem:[%s2 + $0x8] sm:$0xff]
    %v234 = vld [vmem:[%s2 + $0x10] sm:$0xff]
    %v235 = vld [vmem:[%s2 + $0x18] sm:$0xff]
    %v236 = vld [vmem:[%s2 + $0x20] sm:$0xff]
    %v237 = vld [vmem:[%s2 + $0x28] sm:$0xff]
    %v238 = vld [vmem:[%s2 + $0x30] sm:$0xff]
    %v239 = vld [vmem:[%s2 + $0x38] sm:$0xff]
    %v240 = vld [vmem:[%s2 + $0x40] sm:$0xff]
    %vm241 = vcmask 64512
    %v243 = vsel %vm241, %v232, 0
    %v246 = vsel %vm241, %v233, 0
    %v249 = vsel %vm241, %v234, 0
    %v252 = vsel %vm241, %v235, 0
    %v255 = vsel %vm241, %v236, 0
    %v258 = vsel %vm241, %v237, 0
    %v261 = vsel %vm241, %v238, 0
    %v264 = vsel %vm241, %v239, 0
    %v267 = vsel %vm241, %v240, 0
    %269 = vmatprep.subr.mxu0 %v229
    %270 = vmatpush1.msra.mxu0 %v228
    %271 = vmatprep.subr.mxu0 0.0
    %272 = vmatpush1.msra.mxu0 0.0
    %273 = vmatprep.subr.mxu0 0.0
    %274 = vmatpush1.msra.mxu0 0.0
    %275 = vmatprep.subr.mxu0 0.0
    %276 = vmatpush1.msra.mxu0 0.0
    %277 = vmatprep.subr.mxu0 0.0
    %278 = vmatpush1.msra.mxu0 0.0
    %279 = vmatprep.subr.mxu0 0.0
    %280 = vmatpush1.msra.mxu0 0.0
    %281 = vmatprep.subr.mxu0 0.0
    %282 = vmatpush1.msra.mxu0 0.0
    %283 = vmatprep.subr.mxu0 0.0
    %284 = vmatpush1.msra.mxu0 0.0
    %285 = vmatprep.subr.mxu0 0.0
    %286 = vmatpush1.msra.mxu0 0.0
    %287 = vmatprep.subr.mxu0 0.0
    %288 = vmatpush1.msra.mxu0 0.0
    %289 = vmatprep.subr.mxu0 0.0
    %290 = vmatpush1.msra.mxu0 0.0
    %291 = vmatprep.subr.mxu0 0.0
    %292 = vmatpush1.msra.mxu0 0.0
    %293 = vmatprep.subr.mxu0 0.0
    %294 = vmatpush1.msra.mxu0 0.0
    %295 = vmatprep.subr.mxu0 0.0
    %296 = vmatpush1.msra.mxu0 0.0
    %297 = vmatprep.subr.mxu0 0.0
    %298 = vmatpush1.msra.mxu0 0.0
    %299 = vmatprep.subr.mxu0 0.0
    %300 = vmatpush1.msra.mxu0 0.0
    %301 = vmatprep.subr.mxu0 0.0
    %302 = vmatpush1.msra.mxu0 0.0
    %303 = vmatprep.subr.mxu0 0.0
    %304 = vmatpush1.msra.mxu0 0.0
    %305 = vmatprep.subr.mxu0 0.0
    %306 = vmatpush1.msra.mxu0 0.0
    %307 = vmatprep.subr.mxu0 0.0
    %308 = vmatpush1.msra.mxu0 0.0
    %309 = vmatprep.subr.mxu0 0.0
    %310 = vmatpush1.msra.mxu0 0.0
    %311 = vmatprep.subr.mxu0 0.0
    %312 = vmatpush1.msra.mxu0 0.0
    %313 = vmatprep.subr.mxu0 0.0
    %314 = vmatpush1.msra.mxu0 0.0
    %315 = vmatprep.subr.mxu0 0.0
    %316 = vmatpush1.msra.mxu0 0.0
    %317 = vmatprep.subr.mxu0 0.0
    %318 = vmatpush1.msra.mxu0 0.0
    %319 = vmatprep.subr.mxu0 0.0
    %320 = vmatpush1.msra.mxu0 0.0
    %321 = vmatprep.subr.mxu0 0.0
    %322 = vmatpush1.msra.mxu0 0.0
    %323 = vmatprep.subr.mxu0 0.0
    %324 = vmatpush1.msra.mxu0 0.0
    %325 = vmatprep.subr.mxu0 0.0
    %326 = vmatpush1.msra.mxu0 0.0
    %327 = vmatprep.subr.mxu0 0.0
    %328 = vmatpush1.msra.mxu0 0.0
    %329 = vmatprep.subr.mxu0 0.0
    %330 = vmatpush1.msra.mxu0 0.0
    %331 = vmatprep.subr.mxu0 0.0
    %332 = vmatpush1.msra.mxu0 0.0
    %333 = vmatprep.mubr.f32.mxu0 0.0
    %334 = vmatmul.mubr.f32.gmra.mrb[0].mxu0 %v243
    %v335 = vpop.f32.mrb[0].mxu0
    %v336 = vadd.f32 0.0, %v335
    %v337 = vpop.f32.mrb[0].mxu0
    %v338 = vadd.f32 0.0, %v337
    %339 = vmatprep.mubr.f32.mxu0 0.0
    %340 = vmatmul.mubr.f32.gmra.mrb[0].mxu0 %v246
    %v341 = vpop.f32.mrb[0].mxu0
    %v342 = vadd.f32 0.0, %v341
    %v343 = vpop.f32.mrb[0].mxu0
    %v344 = vadd.f32 0.0, %v343
    %345 = vmatprep.mubr.f32.mxu0 0.0
    %346 = vmatmul.mubr.f32.gmra.mrb[0].mxu0 %v249
    %v347 = vpop.f32.mrb[0].mxu0
    %v348 = vadd.f32 0.0, %v347
    %v349 = vpop.f32.mrb[0].mxu0
    %v350 = vadd.f32 0.0, %v349
    %351 = vmatprep.mubr.f32.mxu0 0.0
    %352 = vmatmul.mubr.f32.gmra.mrb[0].mxu0 %v252
    %v353 = vpop.f32.mrb[0].mxu0
    %v354 = vadd.f32 0.0, %v353
    %v355 = vpop.f32.mrb[0].mxu0
    %v356 = vadd.f32 0.0, %v355
    %357 = vmatprep.mubr.f32.mxu0 0.0
    %358 = vmatmul.mubr.f32.gmra.mrb[0].mxu0 %v255
    %v359 = vpop.f32.mrb[0].mxu0
    %v360 = vadd.f32 0.0, %v359
    %v361 = vpop.f32.mrb[0].mxu0
    %v362 = vadd.f32 0.0, %v361
    %363 = vmatprep.mubr.f32.mxu0 0.0
    %364 = vmatmul.mubr.f32.gmra.mrb[0].mxu0 %v258
    %v365 = vpop.f32.mrb[0].mxu0
    %v366 = vadd.f32 0.0, %v365
    %v367 = vpop.f32.mrb[0].mxu0
    %v368 = vadd.f32 0.0, %v367
    %369 = vmatprep.mubr.f32.mxu0 0.0
    %370 = vmatmul.mubr.f32.gmra.mrb[0].mxu0 %v261
    %v371 = vpop.f32.mrb[0].mxu0
    %v372 = vadd.f32 0.0, %v371
    %v373 = vpop.f32.mrb[0].mxu0
    %v374 = vadd.f32 0.0, %v373
    %375 = vmatprep.mubr.f32.mxu0 0.0
    %376 = vmatmul.mubr.f32.gmra.mrb[0].mxu0 %v264
    %v377 = vpop.f32.mrb[0].mxu0
    %v378 = vadd.f32 0.0, %v377
    %v379 = vpop.f32.mrb[0].mxu0
    %v380 = vadd.f32 0.0, %v379
    %381 = vmatprep.mubr.f32.mxu0 0.0
    %382 = vmatmul.mubr.f32.gmra.mrb[0].mxu0 %v267
    %v383 = vpop.f32.mrb[0].mxu0
    %v384 = vadd.f32 0.0, %v383
    %v385 = vpop.f32.mrb[0].mxu0
    %v386 = vadd.f32 0.0, %v385
    %387 = vdwg.mxu0
    %388 = vmatprep.subr.mxu0 %v231
    %389 = vmatpush1.msra.mxu0 %v230
    %390 = vmatprep.subr.mxu0 0.0
    %391 = vmatpush1.msra.mxu0 0.0
    %392 = vmatprep.subr.mxu0 0.0
    %393 = vmatpush1.msra.mxu0 0.0
    %394 = vmatprep.subr.mxu0 0.0
    %395 = vmatpush1.msra.mxu0 0.0
    %396 = vmatprep.subr.mxu0 0.0
    %397 = vmatpush1.msra.mxu0 0.0
    %398 = vmatprep.subr.mxu0 0.0
    %399 = vmatpush1.msra.mxu0 0.0
    %400 = vmatprep.subr.mxu0 0.0
    %401 = vmatpush1.msra.mxu0 0.0
    %402 = vmatprep.subr.mxu0 0.0
    %403 = vmatpush1.msra.mxu0 0.0
    %404 = vmatprep.subr.mxu0 0.0
    %405 = vmatpush1.msra.mxu0 0.0
    %406 = vmatprep.subr.mxu0 0.0
    %407 = vmatpush1.msra.mxu0 0.0
    %408 = vmatprep.subr.mxu0 0.0
    %409 = vmatpush1.msra.mxu0 0.0
    %410 = vmatprep.subr.mxu0 0.0
    %411 = vmatpush1.msra.mxu0 0.0
    %412 = vmatprep.subr.mxu0 0.0
    %413 = vmatpush1.msra.mxu0 0.0
    %414 = vmatprep.subr.mxu0 0.0
    %415 = vmatpush1.msra.mxu0 0.0
    %416 = vmatprep.subr.mxu0 0.0
    %417 = vmatpush1.msra.mxu0 0.0
    %418 = vmatprep.subr.mxu0 0.0
    %419 = vmatpush1.msra.mxu0 0.0
    %420 = vmatprep.subr.mxu0 0.0
    %421 = vmatpush1.msra.mxu0 0.0
    %422 = vmatprep.subr.mxu0 0.0
    %423 = vmatpush1.msra.mxu0 0.0
    %424 = vmatprep.subr.mxu0 0.0
    %425 = vmatpush1.msra.mxu0 0.0
    %426 = vmatprep.subr.mxu0 0.0
    %427 = vmatpush1.msra.mxu0 0.0
    %428 = vmatprep.subr.mxu0 0.0
    %429 = vmatpush1.msra.mxu0 0.0
    %430 = vmatprep.subr.mxu0 0.0
    %431 = vmatpush1.msra.mxu0 0.0
    %432 = vmatprep.subr.mxu0 0.0
    %433 = vmatpush1.msra.mxu0 0.0
    %434 = vmatprep.subr.mxu0 0.0
    %435 = vmatpush1.msra.mxu0 0.0
    %436 = vmatprep.subr.mxu0 0.0
    %437 = vmatpush1.msra.mxu0 0.0
    %438 = vmatprep.subr.mxu0 0.0
    %439 = vmatpush1.msra.mxu0 0.0
    %440 = vmatprep.subr.mxu0 0.0
    %441 = vmatpush1.msra.mxu0 0.0
    %442 = vmatprep.subr.mxu0 0.0
    %443 = vmatpush1.msra.mxu0 0.0
    %444 = vmatprep.subr.mxu0 0.0
    %445 = vmatpush1.msra.mxu0 0.0
    %446 = vmatprep.subr.mxu0 0.0
    %447 = vmatpush1.msra.mxu0 0.0
    %448 = vmatprep.subr.mxu0 0.0
    %449 = vmatpush1.msra.mxu0 0.0
    %450 = vmatprep.subr.mxu0 0.0
    %451 = vmatpush1.msra.mxu0 0.0
    %452 = vmatprep.mubr.f32.mxu0 0.0
    %453 = vmatmul.mubr.f32.gmra.mrb[0].mxu0 %v243
    %v454 = vpop.f32.mrb[0].mxu0
    %v455 = vadd.f32 0.0, %v454
    %v456 = vpop.f32.mrb[0].mxu0
    %v457 = vadd.f32 0.0, %v456
    %458 = vmatprep.mubr.f32.mxu0 0.0
    %459 = vmatmul.mubr.f32.gmra.mrb[0].mxu0 %v246
    %v460 = vpop.f32.mrb[0].mxu0
    %v461 = vadd.f32 0.0, %v460
    %v462 = vpop.f32.mrb[0].mxu0
    %v463 = vadd.f32 0.0, %v462
    %464 = vmatprep.mubr.f32.mxu0 0.0
    %465 = vmatmul.mubr.f32.gmra.mrb[0].mxu0 %v249
    %v466 = vpop.f32.mrb[0].mxu0
    %v467 = vadd.f32 0.0, %v466
    %v468 = vpop.f32.mrb[0].mxu0
    %v469 = vadd.f32 0.0, %v468
    %470 = vmatprep.mubr.f32.mxu0 0.0
    %471 = vmatmul.mubr.f32.gmra.mrb[0].mxu0 %v252
    %v472 = vpop.f32.mrb[0].mxu0
    %v473 = vadd.f32 0.0, %v472
    %v474 = vpop.f32.mrb[0].mxu0
    %v475 = vadd.f32 0.0, %v474
    %476 = vmatprep.mubr.f32.mxu0 0.0
    %477 = vmatmul.mubr.f32.gmra.mrb[0].mxu0 %v255
    %v478 = vpop.f32.mrb[0].mxu0
    %v479 = vadd.f32 0.0, %v478
    %v480 = vpop.f32.mrb[0].mxu0
    %v481 = vadd.f32 0.0, %v480
    %482 = vmatprep.mubr.f32.mxu0 0.0
    %483 = vmatmul.mubr.f32.gmra.mrb[0].mxu0 %v258
    %v484 = vpop.f32.mrb[0].mxu0
    %v485 = vadd.f32 0.0, %v484
    %v486 = vpop.f32.mrb[0].mxu0
    %v487 = vadd.f32 0.0, %v486
    %488 = vmatprep.mubr.f32.mxu0 0.0
    %489 = vmatmul.mubr.f32.gmra.mrb[0].mxu0 %v261
    %v490 = vpop.f32.mrb[0].mxu0
    %v491 = vadd.f32 0.0, %v490
    %v492 = vpop.f32.mrb[0].mxu0
    %v493 = vadd.f32 0.0, %v492
    %494 = vmatprep.mubr.f32.mxu0 0.0
    %495 = vmatmul.mubr.f32.gmra.mrb[0].mxu0 %v264
    %v496 = vpop.f32.mrb[0].mxu0
    %v497 = vadd.f32 0.0, %v496
    %v498 = vpop.f32.mrb[0].mxu0
    %v499 = vadd.f32 0.0, %v498
    %500 = vmatprep.mubr.f32.mxu0 0.0
    %501 = vmatmul.mubr.f32.gmra.mrb[0].mxu0 %v267
    %v502 = vpop.f32.mrb[0].mxu0
    %v503 = vadd.f32 0.0, %v502
    %v504 = vpop.f32.mrb[0].mxu0
    %v505 = vadd.f32 0.0, %v504
    %506 = vdwg.mxu0
    %507 = vrot.lane.b32.xlu0 %v336, 17
    %v508 = vpop.permute.xlu0 %507
    %509 = vrot.lane.b32.xlu0 %v338, 17
    %v510 = vpop.permute.xlu0 %509
    %511 = vrot.lane.b32.xlu0 %v455, 17
    %v512 = vpop.permute.xlu0 %511
    %513 = vrot.lane.b32.xlu0 %v457, 17
    %v514 = vpop.permute.xlu0 %513
    %v515 = vlaneseq
    %v516 = vand.u32 %v515, 127
    %vm517 = vcmp.lt.s32.totalorder %v516, 17
    %v518 = vsel %vm517, %v512, %v514
    %v519 = vsel %vm517, %v510, %v512
    %v520 = vsel %vm517, %v508, %v510
    %v521 = vsel %vm517, %v514, %v508
    %v522 = vld [vmem:[%s6] ss:$8 sm:$0xf]
    %v524 = vlaneseq
    %v525 = vshrl.u32 %v524, 7
    %v526 = vsub.s32 0, %v525
    %v527 = vrot.slane %v522, %v526
    %v528 = vlaneseq
    %v529 = vshrl.u32 %v528, 7
    %v530 = vsub.s32 1, %v529
    %v531 = vrot.slane %v522, %v530
    %v532 = vlaneseq
    %v533 = vshrl.u32 %v532, 7
    %v534 = vsub.s32 2, %v533
    %v535 = vrot.slane %v522, %v534
    %v536 = vlaneseq
    %v537 = vshrl.u32 %v536, 7
    %v538 = vsub.s32 3, %v537
    %v539 = vrot.slane %v522, %v538
    %v544 = vmul.f32 %v521, %v527
    %v545 = vmul.f32 %v520, %v531
    %v546 = vmul.f32 %v519, %v535
    %v547 = vmul.f32 %v518, %v539
    %v548 = vadd.f32 %v360, %v544
    %v549 = vadd.f32 %v362, %v545
    %v550 = vadd.f32 %v479, %v546
    %v551 = vadd.f32 %v481, %v547
    %552 = vrot.lane.b32.xlu0 %v342, 16
    %v553 = vpop.permute.xlu0 %552
    %554 = vrot.lane.b32.xlu0 %v344, 16
    %v555 = vpop.permute.xlu0 %554
    %556 = vrot.lane.b32.xlu0 %v461, 16
    %v557 = vpop.permute.xlu0 %556
    %558 = vrot.lane.b32.xlu0 %v463, 16
    %v559 = vpop.permute.xlu0 %558
    %vm560 = vcmp.lt.s32.totalorder %v516, 16
    %v561 = vsel %vm560, %v557, %v559
    %v562 = vsel %vm560, %v555, %v557
    %v563 = vsel %vm560, %v553, %v555
    %v564 = vsel %vm560, %v559, %v553
    %s565 = scalar_lea.vmem %s6, 1
    %v566 = vld [vmem:[%s565] ss:$8 sm:$0xf]
    %v568 = vlaneseq
    %v569 = vshrl.u32 %v568, 7
    %v570 = vsub.s32 0, %v569
    %v571 = vrot.slane %v566, %v570
    %v572 = vlaneseq
    %v573 = vshrl.u32 %v572, 7
    %v574 = vsub.s32 1, %v573
    %v575 = vrot.slane %v566, %v574
    %v576 = vlaneseq
    %v577 = vshrl.u32 %v576, 7
    %v578 = vsub.s32 2, %v577
    %v579 = vrot.slane %v566, %v578
    %v580 = vlaneseq
    %v581 = vshrl.u32 %v580, 7
    %v582 = vsub.s32 3, %v581
    %v583 = vrot.slane %v566, %v582
    %v588 = vmul.f32 %v564, %v571
    %v589 = vmul.f32 %v563, %v575
    %v590 = vmul.f32 %v562, %v579
    %v591 = vmul.f32 %v561, %v583
    %v592 = vadd.f32 %v548, %v588
    %v593 = vadd.f32 %v549, %v589
    %v594 = vadd.f32 %v550, %v590
    %v595 = vadd.f32 %v551, %v591
    %596 = vrot.lane.b32.xlu0 %v348, 15
    %v597 = vpop.permute.xlu0 %596
    %598 = vrot.lane.b32.xlu0 %v350, 15
    %v599 = vpop.permute.xlu0 %598
    %600 = vrot.lane.b32.xlu0 %v467, 15
    %v601 = vpop.permute.xlu0 %600
    %602 = vrot.lane.b32.xlu0 %v469, 15
    %v603 = vpop.permute.xlu0 %602
    %vm604 = vcmp.lt.s32.totalorder %v516, 15
    %v605 = vsel %vm604, %v601, %v603
    %v606 = vsel %vm604, %v599, %v601
    %v607 = vsel %vm604, %v597, %v599
    %v608 = vsel %vm604, %v603, %v597
    %s609 = scalar_lea.vmem %s6, 2
    %v610 = vld [vmem:[%s609] ss:$8 sm:$0xf]
    %v612 = vlaneseq
    %v613 = vshrl.u32 %v612, 7
    %v614 = vsub.s32 0, %v613
    %v615 = vrot.slane %v610, %v614
    %v616 = vlaneseq
    %v617 = vshrl.u32 %v616, 7
    %v618 = vsub.s32 1, %v617
    %v619 = vrot.slane %v610, %v618
    %v620 = vlaneseq
    %v621 = vshrl.u32 %v620, 7
    %v622 = vsub.s32 2, %v621
    %v623 = vrot.slane %v610, %v622
    %v624 = vlaneseq
    %v625 = vshrl.u32 %v624, 7
    %v626 = vsub.s32 3, %v625
    %v627 = vrot.slane %v610, %v626
    %v632 = vmul.f32 %v608, %v615
    %v633 = vmul.f32 %v607, %v619
    %v634 = vmul.f32 %v606, %v623
    %v635 = vmul.f32 %v605, %v627
    %v636 = vadd.f32 %v592, %v632
    %v637 = vadd.f32 %v593, %v633
    %v638 = vadd.f32 %v594, %v634
    %v639 = vadd.f32 %v595, %v635
    %640 = vrot.lane.b32.xlu0 %v354, 1
    %v641 = vpop.permute.xlu0 %640
    %642 = vrot.lane.b32.xlu0 %v356, 1
    %v643 = vpop.permute.xlu0 %642
    %644 = vrot.lane.b32.xlu0 %v473, 1
    %v645 = vpop.permute.xlu0 %644
    %646 = vrot.lane.b32.xlu0 %v475, 1
    %v647 = vpop.permute.xlu0 %646
    %vm648 = vcmp.lt.s32.totalorder %v516, 1
    %v649 = vsel %vm648, %v645, %v647
    %v650 = vsel %vm648, %v643, %v645
    %v651 = vsel %vm648, %v641, %v643
    %v652 = vsel %vm648, %v647, %v641
    %s653 = scalar_lea.vmem %s6, 3
    %v654 = vld [vmem:[%s653] ss:$8 sm:$0xf]
    %v656 = vlaneseq
    %v657 = vshrl.u32 %v656, 7
    %v658 = vsub.s32 0, %v657
    %v659 = vrot.slane %v654, %v658
    %v660 = vlaneseq
    %v661 = vshrl.u32 %v660, 7
    %v662 = vsub.s32 1, %v661
    %v663 = vrot.slane %v654, %v662
    %v664 = vlaneseq
    %v665 = vshrl.u32 %v664, 7
    %v666 = vsub.s32 2, %v665
    %v667 = vrot.slane %v654, %v666
    %v668 = vlaneseq
    %v669 = vshrl.u32 %v668, 7
    %v670 = vsub.s32 3, %v669
    %v671 = vrot.slane %v654, %v670
    %v676 = vmul.f32 %v652, %v659
    %v677 = vmul.f32 %v651, %v663
    %v678 = vmul.f32 %v650, %v667
    %v679 = vmul.f32 %v649, %v671
    %v680 = vadd.f32 %v636, %v676
    %v681 = vadd.f32 %v637, %v677
    %v682 = vadd.f32 %v638, %v678
    %v683 = vadd.f32 %v639, %v679
    %684 = vrot.lane.b32.xlu0 %v366, 127
    %v685 = vpop.permute.xlu0 %684
    %686 = vrot.lane.b32.xlu0 %v368, 127
    %v687 = vpop.permute.xlu0 %686
    %688 = vrot.lane.b32.xlu0 %v485, 127
    %v689 = vpop.permute.xlu0 %688
    %690 = vrot.lane.b32.xlu0 %v487, 127
    %v691 = vpop.permute.xlu0 %690
    %vm692 = vcmp.lt.s32.totalorder %v516, 127
    %v693 = vsel %vm692, %v689, %v691
    %v694 = vsel %vm692, %v687, %v689
    %v695 = vsel %vm692, %v685, %v687
    %v696 = vsel %vm692, %v691, %v685
    %s697 = scalar_lea.vmem %s6, 5
    %v698 = vld [vmem:[%s697] ss:$8 sm:$0xf]
    %v700 = vlaneseq
    %v701 = vshrl.u32 %v700, 7
    %v702 = vsub.s32 0, %v701
    %v703 = vrot.slane %v698, %v702
    %v704 = vlaneseq
    %v705 = vshrl.u32 %v704, 7
    %v706 = vsub.s32 1, %v705
    %v707 = vrot.slane %v698, %v706
    %v708 = vlaneseq
    %v709 = vshrl.u32 %v708, 7
    %v710 = vsub.s32 2, %v709
    %v711 = vrot.slane %v698, %v710
    %v712 = vlaneseq
    %v713 = vshrl.u32 %v712, 7
    %v714 = vsub.s32 3, %v713
    %v715 = vrot.slane %v698, %v714
    %v720 = vmul.f32 %v695, %v703
    %v721 = vmul.f32 %v694, %v707
    %v722 = vmul.f32 %v693, %v711
    %v723 = vmul.f32 %v696, %v715
    %v724 = vadd.f32 %v680, %v720
    %v725 = vadd.f32 %v681, %v721
    %v726 = vadd.f32 %v682, %v722
    %v727 = vadd.f32 %v683, %v723
    %728 = vrot.lane.b32.xlu0 %v372, 113
    %v729 = vpop.permute.xlu0 %728
    %730 = vrot.lane.b32.xlu0 %v374, 113
    %v731 = vpop.permute.xlu0 %730
    %732 = vrot.lane.b32.xlu0 %v491, 113
    %v733 = vpop.permute.xlu0 %732
    %734 = vrot.lane.b32.xlu0 %v493, 113
    %v735 = vpop.permute.xlu0 %734
    %vm736 = vcmp.lt.s32.totalorder %v516, 113
    %v737 = vsel %vm736, %v733, %v735
    %v738 = vsel %vm736, %v731, %v733
    %v739 = vsel %vm736, %v729, %v731
    %v740 = vsel %vm736, %v735, %v729
    %s741 = scalar_lea.vmem %s6, 6
    %v742 = vld [vmem:[%s741] ss:$8 sm:$0xf]
    %v744 = vlaneseq
    %v745 = vshrl.u32 %v744, 7
    %v746 = vsub.s32 0, %v745
    %v747 = vrot.slane %v742, %v746
    %v748 = vlaneseq
    %v749 = vshrl.u32 %v748, 7
    %v750 = vsub.s32 1, %v749
    %v751 = vrot.slane %v742, %v750
    %v752 = vlaneseq
    %v753 = vshrl.u32 %v752, 7
    %v754 = vsub.s32 2, %v753
    %v755 = vrot.slane %v742, %v754
    %v756 = vlaneseq
    %v757 = vshrl.u32 %v756, 7
    %v758 = vsub.s32 3, %v757
    %v759 = vrot.slane %v742, %v758
    %v764 = vmul.f32 %v739, %v747
    %v765 = vmul.f32 %v738, %v751
    %v766 = vmul.f32 %v737, %v755
    %v767 = vmul.f32 %v740, %v759
    %v768 = vadd.f32 %v724, %v764
    %v769 = vadd.f32 %v725, %v765
    %v770 = vadd.f32 %v726, %v766
    %v771 = vadd.f32 %v727, %v767
    %772 = vrot.lane.b32.xlu0 %v378, 112
    %v773 = vpop.permute.xlu0 %772
    %774 = vrot.lane.b32.xlu0 %v380, 112
    %v775 = vpop.permute.xlu0 %774
    %776 = vrot.lane.b32.xlu0 %v497, 112
    %v777 = vpop.permute.xlu0 %776
    %778 = vrot.lane.b32.xlu0 %v499, 112
    %v779 = vpop.permute.xlu0 %778
    %vm780 = vcmp.lt.s32.totalorder %v516, 112
    %v781 = vsel %vm780, %v777, %v779
    %v782 = vsel %vm780, %v775, %v777
    %v783 = vsel %vm780, %v773, %v775
    %v784 = vsel %vm780, %v779, %v773
    %s785 = scalar_lea.vmem %s6, 7
    %v786 = vld [vmem:[%s785] ss:$8 sm:$0xf]
    %v788 = vlaneseq
    %v789 = vshrl.u32 %v788, 7
    %v790 = vsub.s32 0, %v789
    %v791 = vrot.slane %v786, %v790
    %v792 = vlaneseq
    %v793 = vshrl.u32 %v792, 7
    %v794 = vsub.s32 1, %v793
    %v795 = vrot.slane %v786, %v794
    %v796 = vlaneseq
    %v797 = vshrl.u32 %v796, 7
    %v798 = vsub.s32 2, %v797
    %v799 = vrot.slane %v786, %v798
    %v800 = vlaneseq
    %v801 = vshrl.u32 %v800, 7
    %v802 = vsub.s32 3, %v801
    %v803 = vrot.slane %v786, %v802
    %v808 = vmul.f32 %v783, %v791
    %v809 = vmul.f32 %v782, %v795
    %v810 = vmul.f32 %v781, %v799
    %v811 = vmul.f32 %v784, %v803
    %v812 = vadd.f32 %v768, %v808
    %v813 = vadd.f32 %v769, %v809
    %v814 = vadd.f32 %v770, %v810
    %v815 = vadd.f32 %v771, %v811
    %816 = vrot.lane.b32.xlu0 %v384, 111
    %v817 = vpop.permute.xlu0 %816
    %818 = vrot.lane.b32.xlu0 %v386, 111
    %v819 = vpop.permute.xlu0 %818
    %820 = vrot.lane.b32.xlu0 %v503, 111
    %v821 = vpop.permute.xlu0 %820
    %822 = vrot.lane.b32.xlu0 %v505, 111
    %v823 = vpop.permute.xlu0 %822
    %vm824 = vcmp.lt.s32.totalorder %v516, 111
    %v825 = vsel %vm824, %v821, %v823
    %v826 = vsel %vm824, %v819, %v821
    %v827 = vsel %vm824, %v817, %v819
    %v828 = vsel %vm824, %v823, %v817
    %s829 = scalar_lea.vmem %s6, 32
    %v830 = vld [vmem:[%s829] ss:$8 sm:$0xf]
    %v832 = vlaneseq
    %v833 = vshrl.u32 %v832, 7
    %v834 = vsub.s32 0, %v833
    %v835 = vrot.slane %v830, %v834
    %v836 = vlaneseq
    %v837 = vshrl.u32 %v836, 7
    %v838 = vsub.s32 1, %v837
    %v839 = vrot.slane %v830, %v838
    %v840 = vlaneseq
    %v841 = vshrl.u32 %v840, 7
    %v842 = vsub.s32 2, %v841
    %v843 = vrot.slane %v830, %v842
    %v844 = vlaneseq
    %v845 = vshrl.u32 %v844, 7
    %v846 = vsub.s32 3, %v845
    %v847 = vrot.slane %v830, %v846
    %v852 = vmul.f32 %v827, %v835
    %v853 = vmul.f32 %v826, %v839
    %v854 = vmul.f32 %v825, %v843
    %v855 = vmul.f32 %v828, %v847
    %v856 = vadd.f32 %v812, %v852
    %v857 = vadd.f32 %v813, %v853
    %v858 = vadd.f32 %v814, %v854
    %v859 = vadd.f32 %v815, %v855
    %860 = vset.pattern.permute.xlu0 1
    %861 = vperm.xlu0 %860, %v54
    %v862 = vpop.permute.xlu0 %861
    %v864 = vadd.f32 %v856, %v862
    %v865 = vadd.f32 %v857, %v862
    %v866 = vadd.f32 %v858, %v862
    %v867 = vadd.f32 %v859, %v862
    %v868 = vmax.f32 %v864, 0.0
    %v869 = vmax.f32 %v865, 0.0
    %v870 = vmax.f32 %v866, 0.0
    %v871 = vmax.f32 %v867, 0.0
    %v872 = vmin.f32 %v864, 0.0
    %v873 = vmin.f32 %v865, 0.0
    %v874 = vmin.f32 %v866, 0.0
    %v875 = vmin.f32 %v867, 0.0
    %v876 = vstv %s44
    %v877 = vmul.f32 %v876, %v872
    %v878 = vmul.f32 %v876, %v873
    %v879 = vmul.f32 %v876, %v874
    %v880 = vmul.f32 %v876, %v875
    %v881 = vadd.f32 %v868, %v877
    %v882 = vadd.f32 %v869, %v878
    %v883 = vadd.f32 %v870, %v879
    %v884 = vadd.f32 %v871, %v880
    %v885 = vld [vmem:[%s3] sm:$0xff]
    %v886 = vld [vmem:[%s4] sm:$0xff]
    %v888 = vsel %vm60, %v886, 0
    %890 = vmatprep.subr.mxu0 %v67
    %891 = vmatpush1.msra.mxu0 %v65
    %892 = vmatprep.subr.mxu0 0.0
    %893 = vmatpush1.msra.mxu0 0.0
    %894 = vmatprep.subr.mxu0 0.0
    %895 = vmatpush1.msra.mxu0 0.0
    %896 = vmatprep.subr.mxu0 0.0
    %897 = vmatpush1.msra.mxu0 0.0
    %898 = vmatprep.subr.mxu0 0.0
    %899 = vmatpush1.msra.mxu0 0.0
    %900 = vmatprep.subr.mxu0 0.0
    %901 = vmatpush1.msra.mxu0 0.0
    %902 = vmatprep.subr.mxu0 0.0
    %903 = vmatpush1.msra.mxu0 0.0
    %904 = vmatprep.subr.mxu0 0.0
    %905 = vmatpush1.msra.mxu0 0.0
    %906 = vmatprep.subr.mxu0 0.0
    %907 = vmatpush1.msra.mxu0 0.0
    %908 = vmatprep.subr.mxu0 0.0
    %909 = vmatpush1.msra.mxu0 0.0
    %910 = vmatprep.subr.mxu0 0.0
    %911 = vmatpush1.msra.mxu0 0.0
    %912 = vmatprep.subr.mxu0 0.0
    %913 = vmatpush1.msra.mxu0 0.0
    %914 = vmatprep.subr.mxu0 0.0
    %915 = vmatpush1.msra.mxu0 0.0
    %916 = vmatprep.subr.mxu0 0.0
    %917 = vmatpush1.msra.mxu0 0.0
    %918 = vmatprep.subr.mxu0 0.0
    %919 = vmatpush1.msra.mxu0 0.0
    %920 = vmatprep.subr.mxu0 0.0
    %921 = vmatpush1.msra.mxu0 0.0
    %922 = vmatprep.subr.mxu0 0.0
    %923 = vmatpush1.msra.mxu0 0.0
    %924 = vmatprep.subr.mxu0 0.0
    %925 = vmatpush1.msra.mxu0 0.0
    %926 = vmatprep.subr.mxu0 0.0
    %927 = vmatpush1.msra.mxu0 0.0
    %928 = vmatprep.subr.mxu0 0.0
    %929 = vmatpush1.msra.mxu0 0.0
    %930 = vmatprep.subr.mxu0 0.0
    %931 = vmatpush1.msra.mxu0 0.0
    %932 = vmatprep.subr.mxu0 0.0
    %933 = vmatpush1.msra.mxu0 0.0
    %934 = vmatprep.subr.mxu0 0.0
    %935 = vmatpush1.msra.mxu0 0.0
    %936 = vmatprep.subr.mxu0 0.0
    %937 = vmatpush1.msra.mxu0 0.0
    %938 = vmatprep.subr.mxu0 0.0
    %939 = vmatpush1.msra.mxu0 0.0
    %940 = vmatprep.subr.mxu0 0.0
    %941 = vmatpush1.msra.mxu0 0.0
    %942 = vmatprep.subr.mxu0 0.0
    %943 = vmatpush1.msra.mxu0 0.0
    %944 = vmatprep.subr.mxu0 0.0
    %945 = vmatpush1.msra.mxu0 0.0
    %946 = vmatprep.subr.mxu0 0.0
    %947 = vmatpush1.msra.mxu0 0.0
    %948 = vmatprep.subr.mxu0 0.0
    %949 = vmatpush1.msra.mxu0 0.0
    %950 = vmatprep.subr.mxu0 0.0
    %951 = vmatpush1.msra.mxu0 0.0
    %952 = vmatprep.subr.mxu0 0.0
    %953 = vmatpush1.msra.mxu0 0.0
    %954 = vmatprep.mubr.f32.mxu0 0.0
    %955 = vmatmul.mubr.f32.gmra.mrb[0].mxu0 %v888
    %v956 = vpop.f32.mrb[0].mxu0
    %v957 = vadd.f32 0.0, %v956
    %v958 = vpop.f32.mrb[0].mxu0
    %v959 = vadd.f32 0.0, %v958
    %960 = vdwg.mxu0
    %961 = vmatprep.subr.mxu0 %v71
    %962 = vmatpush1.msra.mxu0 %v69
    %963 = vmatprep.subr.mxu0 0.0
    %964 = vmatpush1.msra.mxu0 0.0
    %965 = vmatprep.subr.mxu0 0.0
    %966 = vmatpush1.msra.mxu0 0.0
    %967 = vmatprep.subr.mxu0 0.0
    %968 = vmatpush1.msra.mxu0 0.0
    %969 = vmatprep.subr.mxu0 0.0
    %970 = vmatpush1.msra.mxu0 0.0
    %971 = vmatprep.subr.mxu0 0.0
    %972 = vmatpush1.msra.mxu0 0.0
    %973 = vmatprep.subr.mxu0 0.0
    %974 = vmatpush1.msra.mxu0 0.0
    %975 = vmatprep.subr.mxu0 0.0
    %976 = vmatpush1.msra.mxu0 0.0
    %977 = vmatprep.subr.mxu0 0.0
    %978 = vmatpush1.msra.mxu0 0.0
    %979 = vmatprep.subr.mxu0 0.0
    %980 = vmatpush1.msra.mxu0 0.0
    %981 = vmatprep.subr.mxu0 0.0
    %982 = vmatpush1.msra.mxu0 0.0
    %983 = vmatprep.subr.mxu0 0.0
    %984 = vmatpush1.msra.mxu0 0.0
    %985 = vmatprep.subr.mxu0 0.0
    %986 = vmatpush1.msra.mxu0 0.0
    %987 = vmatprep.subr.mxu0 0.0
    %988 = vmatpush1.msra.mxu0 0.0
    %989 = vmatprep.subr.mxu0 0.0
    %990 = vmatpush1.msra.mxu0 0.0
    %991 = vmatprep.subr.mxu0 0.0
    %992 = vmatpush1.msra.mxu0 0.0
    %993 = vmatprep.subr.mxu0 0.0
    %994 = vmatpush1.msra.mxu0 0.0
    %995 = vmatprep.subr.mxu0 0.0
    %996 = vmatpush1.msra.mxu0 0.0
    %997 = vmatprep.subr.mxu0 0.0
    %998 = vmatpush1.msra.mxu0 0.0
    %999 = vmatprep.subr.mxu0 0.0
    %1000 = vmatpush1.msra.mxu0 0.0
    %1001 = vmatprep.subr.mxu0 0.0
    %1002 = vmatpush1.msra.mxu0 0.0
    %1003 = vmatprep.subr.mxu0 0.0
    %1004 = vmatpush1.msra.mxu0 0.0
    %1005 = vmatprep.subr.mxu0 0.0
    %1006 = vmatpush1.msra.mxu0 0.0
    %1007 = vmatprep.subr.mxu0 0.0
    %1008 = vmatpush1.msra.mxu0 0.0
    %1009 = vmatprep.subr.mxu0 0.0
    %1010 = vmatpush1.msra.mxu0 0.0
    %1011 = vmatprep.subr.mxu0 0.0
    %1012 = vmatpush1.msra.mxu0 0.0
    %1013 = vmatprep.subr.mxu0 0.0
    %1014 = vmatpush1.msra.mxu0 0.0
    %1015 = vmatprep.subr.mxu0 0.0
    %1016 = vmatpush1.msra.mxu0 0.0
    %1017 = vmatprep.subr.mxu0 0.0
    %1018 = vmatpush1.msra.mxu0 0.0
    %1019 = vmatprep.subr.mxu0 0.0
    %1020 = vmatpush1.msra.mxu0 0.0
    %1021 = vmatprep.subr.mxu0 0.0
    %1022 = vmatpush1.msra.mxu0 0.0
    %1023 = vmatprep.subr.mxu0 0.0
    %1024 = vmatpush1.msra.mxu0 0.0
    %1025 = vmatprep.mubr.f32.mxu0 0.0
    %1026 = vmatmul.mubr.f32.gmra.mrb[0].mxu0 %v888
    %v1027 = vpop.f32.mrb[0].mxu0
    %v1028 = vadd.f32 0.0, %v1027
    %v1029 = vpop.f32.mrb[0].mxu0
    %v1030 = vadd.f32 0.0, %v1029
    %1031 = vdwg.mxu0
    %v1033 = vsel %vm241, %v885, 0
    %1035 = vmatprep.subr.mxu0 %v882
    %1036 = vmatpush1.msra.mxu0 %v881
    %1037 = vmatprep.subr.mxu0 0.0
    %1038 = vmatpush1.msra.mxu0 0.0
    %1039 = vmatprep.subr.mxu0 0.0
    %1040 = vmatpush1.msra.mxu0 0.0
    %1041 = vmatprep.subr.mxu0 0.0
    %1042 = vmatpush1.msra.mxu0 0.0
    %1043 = vmatprep.subr.mxu0 0.0
    %1044 = vmatpush1.msra.mxu0 0.0
    %1045 = vmatprep.subr.mxu0 0.0
    %1046 = vmatpush1.msra.mxu0 0.0
    %1047 = vmatprep.subr.mxu0 0.0
    %1048 = vmatpush1.msra.mxu0 0.0
    %1049 = vmatprep.subr.mxu0 0.0
    %1050 = vmatpush1.msra.mxu0 0.0
    %1051 = vmatprep.subr.mxu0 0.0
    %1052 = vmatpush1.msra.mxu0 0.0
    %1053 = vmatprep.subr.mxu0 0.0
    %1054 = vmatpush1.msra.mxu0 0.0
    %1055 = vmatprep.subr.mxu0 0.0
    %1056 = vmatpush1.msra.mxu0 0.0
    %1057 = vmatprep.subr.mxu0 0.0
    %1058 = vmatpush1.msra.mxu0 0.0
    %1059 = vmatprep.subr.mxu0 0.0
    %1060 = vmatpush1.msra.mxu0 0.0
    %1061 = vmatprep.subr.mxu0 0.0
    %1062 = vmatpush1.msra.mxu0 0.0
    %1063 = vmatprep.subr.mxu0 0.0
    %1064 = vmatpush1.msra.mxu0 0.0
    %1065 = vmatprep.subr.mxu0 0.0
    %1066 = vmatpush1.msra.mxu0 0.0
    %1067 = vmatprep.subr.mxu0 0.0
    %1068 = vmatpush1.msra.mxu0 0.0
    %1069 = vmatprep.subr.mxu0 0.0
    %1070 = vmatpush1.msra.mxu0 0.0
    %1071 = vmatprep.subr.mxu0 0.0
    %1072 = vmatpush1.msra.mxu0 0.0
    %1073 = vmatprep.subr.mxu0 0.0
    %1074 = vmatpush1.msra.mxu0 0.0
    %1075 = vmatprep.subr.mxu0 0.0
    %1076 = vmatpush1.msra.mxu0 0.0
    %1077 = vmatprep.subr.mxu0 0.0
    %1078 = vmatpush1.msra.mxu0 0.0
    %1079 = vmatprep.subr.mxu0 0.0
    %1080 = vmatpush1.msra.mxu0 0.0
    %1081 = vmatprep.subr.mxu0 0.0
    %1082 = vmatpush1.msra.mxu0 0.0
    %1083 = vmatprep.subr.mxu0 0.0
    %1084 = vmatpush1.msra.mxu0 0.0
    %1085 = vmatprep.subr.mxu0 0.0
    %1086 = vmatpush1.msra.mxu0 0.0
    %1087 = vmatprep.subr.mxu0 0.0
    %1088 = vmatpush1.msra.mxu0 0.0
    %1089 = vmatprep.subr.mxu0 0.0
    %1090 = vmatpush1.msra.mxu0 0.0
    %1091 = vmatprep.subr.mxu0 0.0
    %1092 = vmatpush1.msra.mxu0 0.0
    %1093 = vmatprep.subr.mxu0 0.0
    %1094 = vmatpush1.msra.mxu0 0.0
    %1095 = vmatprep.subr.mxu0 0.0
    %1096 = vmatpush1.msra.mxu0 0.0
    %1097 = vmatprep.subr.mxu0 0.0
    %1098 = vmatpush1.msra.mxu0 0.0
    %1099 = vmatprep.mubr.f32.mxu0 0.0
    %1100 = vmatmul.mubr.f32.gmra.mrb[0].mxu0 %v1033
    %v1101 = vpop.f32.mrb[0].mxu0
    %v1102 = vadd.f32 %v957, %v1101
    %v1103 = vpop.f32.mrb[0].mxu0
    %v1104 = vadd.f32 %v959, %v1103
    %1105 = vdwg.mxu0
    %1106 = vmatprep.subr.mxu0 %v884
    %1107 = vmatpush1.msra.mxu0 %v883
    %1108 = vmatprep.subr.mxu0 0.0
    %1109 = vmatpush1.msra.mxu0 0.0
    %1110 = vmatprep.subr.mxu0 0.0
    %1111 = vmatpush1.msra.mxu0 0.0
    %1112 = vmatprep.subr.mxu0 0.0
    %1113 = vmatpush1.msra.mxu0 0.0
    %1114 = vmatprep.subr.mxu0 0.0
    %1115 = vmatpush1.msra.mxu0 0.0
    %1116 = vmatprep.subr.mxu0 0.0
    %1117 = vmatpush1.msra.mxu0 0.0
    %1118 = vmatprep.subr.mxu0 0.0
    %1119 = vmatpush1.msra.mxu0 0.0
    %1120 = vmatprep.subr.mxu0 0.0
    %1121 = vmatpush1.msra.mxu0 0.0
    %1122 = vmatprep.subr.mxu0 0.0
    %1123 = vmatpush1.msra.mxu0 0.0
    %1124 = vmatprep.subr.mxu0 0.0
    %1125 = vmatpush1.msra.mxu0 0.0
    %1126 = vmatprep.subr.mxu0 0.0
    %1127 = vmatpush1.msra.mxu0 0.0
    %1128 = vmatprep.subr.mxu0 0.0
    %1129 = vmatpush1.msra.mxu0 0.0
    %1130 = vmatprep.subr.mxu0 0.0
    %1131 = vmatpush1.msra.mxu0 0.0
    %1132 = vmatprep.subr.mxu0 0.0
    %1133 = vmatpush1.msra.mxu0 0.0
    %1134 = vmatprep.subr.mxu0 0.0
    %1135 = vmatpush1.msra.mxu0 0.0
    %1136 = vmatprep.subr.mxu0 0.0
    %1137 = vmatpush1.msra.mxu0 0.0
    %1138 = vmatprep.subr.mxu0 0.0
    %1139 = vmatpush1.msra.mxu0 0.0
    %1140 = vmatprep.subr.mxu0 0.0
    %1141 = vmatpush1.msra.mxu0 0.0
    %1142 = vmatprep.subr.mxu0 0.0
    %1143 = vmatpush1.msra.mxu0 0.0
    %1144 = vmatprep.subr.mxu0 0.0
    %1145 = vmatpush1.msra.mxu0 0.0
    %1146 = vmatprep.subr.mxu0 0.0
    %1147 = vmatpush1.msra.mxu0 0.0
    %1148 = vmatprep.subr.mxu0 0.0
    %1149 = vmatpush1.msra.mxu0 0.0
    %1150 = vmatprep.subr.mxu0 0.0
    %1151 = vmatpush1.msra.mxu0 0.0
    %1152 = vmatprep.subr.mxu0 0.0
    %1153 = vmatpush1.msra.mxu0 0.0
    %1154 = vmatprep.subr.mxu0 0.0
    %1155 = vmatpush1.msra.mxu0 0.0
    %1156 = vmatprep.subr.mxu0 0.0
    %1157 = vmatpush1.msra.mxu0 0.0
    %1158 = vmatprep.subr.mxu0 0.0
    %1159 = vmatpush1.msra.mxu0 0.0
    %1160 = vmatprep.subr.mxu0 0.0
    %1161 = vmatpush1.msra.mxu0 0.0
    %1162 = vmatprep.subr.mxu0 0.0
    %1163 = vmatpush1.msra.mxu0 0.0
    %1164 = vmatprep.subr.mxu0 0.0
    %1165 = vmatpush1.msra.mxu0 0.0
    %1166 = vmatprep.subr.mxu0 0.0
    %1167 = vmatpush1.msra.mxu0 0.0
    %1168 = vmatprep.subr.mxu0 0.0
    %1169 = vmatpush1.msra.mxu0 0.0
    %1170 = vmatprep.mubr.f32.mxu0 0.0
    %1171 = vmatmul.mubr.f32.gmra.mrb[0].mxu0 %v1033
    %v1172 = vpop.f32.mrb[0].mxu0
    %v1173 = vadd.f32 %v1028, %v1172
    %v1174 = vpop.f32.mrb[0].mxu0
    %v1175 = vadd.f32 %v1030, %v1174
    %1176 = vdwg.mxu0
    %1177 = vset.pattern.permute.xlu0 2
    %1178 = vperm.xlu0 %1177, %v54
    %v1179 = vpop.permute.xlu0 %1178
    %v1181 = vadd.f32 %v1102, %v1179
    %v1182 = vadd.f32 %v1104, %v1179
    %v1183 = vadd.f32 %v1173, %v1179
    %v1184 = vadd.f32 %v1175, %v1179
    %v1185 = vmax.f32 %v1181, 0.0
    %v1186 = vmax.f32 %v1182, 0.0
    %v1187 = vmax.f32 %v1183, 0.0
    %v1188 = vmax.f32 %v1184, 0.0
    %v1189 = vmin.f32 %v1181, 0.0
    %v1190 = vmin.f32 %v1182, 0.0
    %v1191 = vmin.f32 %v1183, 0.0
    %v1192 = vmin.f32 %v1184, 0.0
    %v1193 = vstv %s45
    %v1194 = vmul.f32 %v1193, %v1189
    %v1195 = vmul.f32 %v1193, %v1190
    %v1196 = vmul.f32 %v1193, %v1191
    %v1197 = vmul.f32 %v1193, %v1192
    %v1198 = vadd.f32 %v1185, %v1194
    %v1199 = vadd.f32 %v1186, %v1195
    %v1200 = vadd.f32 %v1187, %v1196
    %v1201 = vadd.f32 %v1188, %v1197
    %1202 = vst [vmem:[#allocation5] sm:$0xff] %v1198
    %1203 = vst [vmem:[#allocation5 + $0x8] sm:$0xff] %v1199
    %s1204 = scalar_lea.vmem [#allocation5], 16
    %1205 = vst [vmem:[%s1204] sm:$0xff] %v1200
    %1206 = vst [vmem:[%s1204 + $0x8] sm:$0xff] %v1201
    // Predicated region
    $region38: #{tpu_custom_call.1} parent=1 // pred_check
      _
    $region39: #{tpu_custom_call.1} parent=1 // pred_check_branch
      %1208 = sbr.rel (0) target = $region41
    $region40: #{tpu_custom_call.1} parent=1 // pred_region
      %s1210 = ssub.s32 512, 512
      %1211 = vsyncadd [#allocation3], %s1210
      %s1212 = sshll.u32 [#allocation5], 4
      %s1213 = int_to_ptr.vmem [resolvable:$true] %s1212
      %1218 = dma.vmem_to_hbm [thread:$0]  %s1213, 512, %s8, [#allocation3], 256, 256, 16
    $region41: #{tpu_custom_call.1} parent=1 // pred_fallthru
      _
    // Predicated region
    $region42: #{tpu_custom_call.1} parent=1 // pred_check
      _
    $region43: #{tpu_custom_call.1} parent=1 // pred_check_branch
      %1220 = sbr.rel (0) target = $region45
    $region44: #{tpu_custom_call.1} parent=1 // pred_region
      %1221 = dma.done [#allocation3], 512
    $region45: #{tpu_custom_call.1} parent=1 // pred_fallthru
      _
    %1222 = vsyncpa [#allocation3], 1
    %1223 = vsyncpa [#allocation4], 1

</llo_original>
